<compile_context>
chip_gen: v6e
topology: v6e:2x2x1
jax: 0.10.0
libtpu: 0.0.40
codegen_flags: <defaults>
</compile_context>

<pallas_src>
import jax
import jax.numpy as jnp
from jax import lax
from jax.experimental import pallas as pl
from jax.experimental.pallas import tpu as pltpu


def _round_up(x, m):
    return ((x + m - 1) // m) * m


def _logit_kernel(hid_ref, attn_ref, mpos_ref, w1_ref, b1_ref, w2_ref, b2_ref,
                  out_ref):
    # hid tile: (TB, S, Hp) bf16 -> f32 (upcast immediately: v5e has no bf16 VPU)
    hid = hid_ref[...].astype(jnp.float32)
    attn = attn_ref[...]                                 # (TB, S)  f32
    mpos = mpos_ref[...]                                 # (TB, 1)  i32
    TB, S, Hp = hid.shape

    # --- fused (mask-pos gather + masked mean pool) as ONE weighted reduction ---
    seq_ids = lax.broadcasted_iota(jnp.int32, (TB, S), 1)
    onehot = (seq_ids == mpos).astype(jnp.float32)       # (TB, S)
    denom = jnp.sum(attn, axis=1, keepdims=True)         # (TB, 1)
    inv_denom = pl.reciprocal(jnp.maximum(denom, 1.0), approx=True)  # EUP, guard 0-mask
    w = attn * inv_denom + onehot                        # (TB, S)
    x = jnp.sum(hid * w[:, :, None], axis=1)             # (TB, Hp): one mul + one reduce

    # --- classification head (MXU matmuls, f32 accumulation) ---
    feat = jnp.tanh(
        jnp.dot(x, w1_ref[...], preferred_element_type=jnp.float32) + b1_ref[...])
    out_ref[...] = (
        jnp.dot(feat, w2_ref[...], preferred_element_type=jnp.float32) + b2_ref[...])


class LogitModelWrapperPallas:
    """JAX/Pallas analogue of LogitModelWrapper with a synthetic inner model."""

    def __init__(self, key, vocab_size, hidden, num_labels, binary_classification):
        if binary_classification:
            assert num_labels == 2, "--binary_classification should have 2 logits"
        self.H = hidden
        self.Hp = _round_up(hidden, 128)           # lane-pad hidden dim
        self.num_labels = num_labels
        self.binary_classification = binary_classification
        self.out_cols = 1 if binary_classification else num_labels
        self.NLp = _round_up(self.out_cols, 128)   # lane-dense output store

        k_emb, k_w1, k_w2 = jax.random.split(key, 3)
        emb = 0.02 * jax.random.normal(k_emb, (vocab_size, hidden), jnp.float32)
        w1 = 0.05 * jax.random.normal(k_w1, (hidden, hidden), jnp.float32)
        w2 = 0.05 * jax.random.normal(k_w2, (hidden, num_labels), jnp.float32)

        # Zero-pad H -> Hp once; padded rows/cols contribute exactly zero.
        emb_p = jnp.zeros((vocab_size, self.Hp), jnp.float32).at[:, :hidden].set(emb)
        self.embedding = emb_p.astype(jnp.bfloat16)   # bf16 halves HBM traffic on hid
        self.w1 = jnp.zeros((self.Hp, self.Hp), jnp.float32).at[:hidden, :hidden].set(w1)
        self.b1 = jnp.zeros((1, self.Hp), jnp.float32)
        # Unfolded head kept for the pure-JAX reference.
        self.w2 = jnp.zeros((self.Hp, num_labels), jnp.float32).at[:hidden, :].set(w2)
        self.b2 = jnp.zeros((1, num_labels), jnp.float32)

        # Fold the binary logit difference into the classifier weights,
        # then pad the output lane dim to 128.
        if binary_classification:
            w2_eff = self.w2[:, 1:2] - self.w2[:, 0:1]     # (Hp, 1)
            b2_eff = self.b2[:, 1:2] - self.b2[:, 0:1]     # (1, 1)
        else:
            w2_eff, b2_eff = self.w2, self.b2
        self.w2_eff = jnp.zeros((self.Hp, self.NLp), jnp.float32
                                ).at[:, : self.out_cols].set(w2_eff)
        self.b2_eff = jnp.zeros((1, self.NLp), jnp.float32
                                ).at[:, : self.out_cols].set(b2_eff)

    def __call__(self, input_ids, attention_mask, mask_pos):
        B, S = input_ids.shape
        Hp, NLp = self.Hp, self.NLp

        # Glue: embedding gather stays in the wrapper, but in bf16 (half the bytes).
        # TODO(synk): move the gather in-kernel (memory_space=pl.ANY embedding +
        # per-row manual DMA driven by input_ids in SMEM) to avoid materializing hid.
        hid = jnp.take(self.embedding, input_ids, axis=0)      # (B, S, Hp) bf16
        attn = attention_mask.astype(jnp.float32)              # (B, S)
        mpos = mask_pos.reshape(B, 1).astype(jnp.int32)        # (B, 1)

        # Batch tile: largest divisor of B up to 8 (keeps hid tile well under the
        # v7x 32 MiB scoped budget even at S=512, H=1024 bf16 with double-buffering).
        TB = 1
        for cand in (8, 4, 2, 1):
            if B % cand == 0:
                TB = cand
                break
        grid = (B // TB,)

        flops = 2 * B * S * Hp + 2 * B * Hp * Hp + 2 * B * Hp * NLp
        bytes_accessed = (hid.size * 2 + attn.size * 4 + mpos.size * 4
                          + self.w1.size * 4 + self.b1.size * 4
                          + self.w2_eff.size * 4 + self.b2_eff.size * 4
                          + B * NLp * 4)

        out = pl.pallas_call(
            _logit_kernel,
            out_shape=jax.ShapeDtypeStruct((B, NLp), jnp.float32),
            grid_spec=pltpu.PrefetchScalarGridSpec(
                num_scalar_prefetch=0,
                grid=grid,
                in_specs=[
                    pl.BlockSpec((TB, S, Hp), lambda i: (i, 0, 0)),   # hid tile
                    pl.BlockSpec((TB, S), lambda i: (i, 0)),          # attn tile
                    pl.BlockSpec((TB, 1), lambda i: (i, 0)),          # mask_pos tile
                    pl.BlockSpec((Hp, Hp), lambda i: (0, 0)),         # W1 (resident)
                    pl.BlockSpec((1, Hp), lambda i: (0, 0)),          # b1 (resident)
                    pl.BlockSpec((Hp, NLp), lambda i: (0, 0)),        # W2_eff (resident)
                    pl.BlockSpec((1, NLp), lambda i: (0, 0)),         # b2_eff (resident)
                ],
                out_specs=pl.BlockSpec((TB, NLp), lambda i: (i, 0)),
            ),
            compiler_params=pltpu.CompilerParams(
                dimension_semantics=("parallel",),      # shard batch over v7x's 2 TCs
                vmem_limit_bytes=64 * 1024 * 1024),
            cost_estimate=pl.CostEstimate(
                flops=flops, transcendentals=B * Hp, bytes_accessed=bytes_accessed),
        )(hid, attn, mpos, self.w1, self.b1, self.w2_eff, self.b2_eff)

        return out[:, : self.out_cols]                  # strip lane padding


def _reference(model, input_ids, attention_mask, mask_pos):
    """Pure-JAX reference (same bf16-quantized embedding, unfolded head)."""
    hid = jnp.take(model.embedding, input_ids, axis=0).astype(jnp.float32)
    attn = attention_mask.astype(jnp.float32)
    onehot = jax.nn.one_hot(mask_pos, hid.shape[1], dtype=jnp.float32)
    mask_hidden = jnp.einsum("bs,bsh->bh", onehot, hid)
    pooled = jnp.einsum("bs,bsh->bh", attn, hid) / jnp.sum(attn, 1, keepdims=True)
    feat = jnp.tanh((pooled + mask_hidden) @ model.w1 + model.b1)
    logits = feat @ model.w2 + model.b2
    if model.binary_classification:
        return (logits[:, 1] - logits[:, 0])[:, None]
    return logits


if __name__ == "__main__":
    B, S, H, V, NL = 2, 8, 32, 64, 2

    key = jax.random.PRNGKey(0)
    k_model, k_ids, k_mask, k_pos = jax.random.split(key, 4)

    model = LogitModelWrapperPallas(
        k_model, vocab_size=V, hidden=H, num_labels=NL,
        binary_classification=True)

    input_ids = jax.random.randint(k_ids, (B, S), 0, V, dtype=jnp.int32)
    # attention mask: first row full, second row has trailing padding
    attention_mask = jnp.array(
        [[1] * S, [1] * (S - 3) + [0] * 3], dtype=jnp.int32)
    mask_pos = jax.random.randint(k_pos, (B,), 0, S - 3, dtype=jnp.int32)

    out = model(input_ids, attention_mask, mask_pos)
    out = jax.block_until_ready(out)

    ref = _reference(model, input_ids, attention_mask, mask_pos)
    assert out.shape == (B, 1), out.shape
    # Tolerance accounts for pl.reciprocal(approx=True) and bf16 activations.
    assert jnp.allclose(out, ref, atol=2e-3, rtol=2e-3), (out, ref)

    print("KERNEL_OK")
</pallas_src>

<mosaic_0001>
module attributes {stable_mosaic.version = 11 : i64} {
  func.func @_logit_kernel(%arg0: i32, %arg1: memref<2x8x128xbf16, #tpu.memory_space<vmem>>, %arg2: memref<2x8xf32, #tpu.memory_space<vmem>>, %arg3: memref<2x1xi32, #tpu.memory_space<vmem>>, %arg4: memref<128x128xf32, #tpu.memory_space<vmem>>, %arg5: memref<1x128xf32, #tpu.memory_space<vmem>>, %arg6: memref<128x128xf32, #tpu.memory_space<vmem>>, %arg7: memref<1x128xf32, #tpu.memory_space<vmem>>, %arg8: memref<2x128xf32, #tpu.memory_space<vmem>>) attributes {dimension_semantics = [#tpu.dimension_semantics<parallel>], iteration_bounds = array<i64: 1>, scalar_prefetch = 0 : i64, scratch_operands = 0 : i64, tpu.core_type = #tpu.core_type<tc>, window_params = [{transform_indices = @transform_0, window_bounds = array<i64: 2, 8, 128>}, {transform_indices = @transform_1, window_bounds = array<i64: 2, 8>}, {transform_indices = @transform_2, window_bounds = array<i64: 2, 1>}, {pipeline_mode = #tpu.pipeline_mode<synchronous>, transform_indices = @transform_3, window_bounds = array<i64: 128, 128>}, {pipeline_mode = #tpu.pipeline_mode<synchronous>, transform_indices = @transform_4, window_bounds = array<i64: 1, 128>}, {pipeline_mode = #tpu.pipeline_mode<synchronous>, transform_indices = @transform_5, window_bounds = array<i64: 128, 128>}, {pipeline_mode = #tpu.pipeline_mode<synchronous>, transform_indices = @transform_6, window_bounds = array<i64: 1, 128>}, {transform_indices = @transform_7, window_bounds = array<i64: 2, 128>}]} {
    %c0 = arith.constant 0 : index
    %c0_0 = arith.constant 0 : index
    %c0_1 = arith.constant 0 : index
    %0 = vector.load %arg1[%c0, %c0_0, %c0_1] : memref<2x8x128xbf16, #tpu.memory_space<vmem>>, vector<2x8x128xbf16>
    %1 = arith.extf %0 : vector<2x8x128xbf16> to vector<2x8x128xf32>
    %c0_2 = arith.constant 0 : index
    %c0_3 = arith.constant 0 : index
    %2 = vector.load %arg2[%c0_2, %c0_3] : memref<2x8xf32, #tpu.memory_space<vmem>>, vector<2x8xf32>
    %c0_4 = arith.constant 0 : index
    %c0_5 = arith.constant 0 : index
    %3 = vector.load %arg3[%c0_4, %c0_5] : memref<2x1xi32, #tpu.memory_space<vmem>>, vector<2x1xi32>
    %4 = tpu.iota {dimensions = array<i32: 1>} : vector<2x8xi32>
    %5 = vector.broadcast %3 : vector<2x1xi32> to vector<2x8xi32>
    %6 = arith.cmpi eq, %4, %5 : vector<2x8xi32>
    %7 = arith.extui %6 : vector<2x8xi1> to vector<2x8xi32>
    %8 = arith.sitofp %7 : vector<2x8xi32> to vector<2x8xf32>
    %cst = arith.constant dense<0.000000e+00> : vector<2xf32>
    %9 = vector.multi_reduction <add>, %2, %cst [1] : vector<2x8xf32> to vector<2xf32>
    %10 = vector.shape_cast %9 : vector<2xf32> to vector<2x1xf32>
    %cst_6 = arith.constant 1.000000e+00 : f32
    %11 = vector.broadcast %cst_6 : f32 to vector<2x1xf32>
    %12 = arith.maximumf %10, %11 : vector<2x1xf32>
    %13 = tpu.reciprocal %12 {approx = true} : vector<2x1xf32> -> vector<2x1xf32>
    %14 = vector.broadcast %13 : vector<2x1xf32> to vector<2x8xf32>
    %15 = arith.mulf %2, %14 : vector<2x8xf32>
    %16 = arith.addf %15, %8 : vector<2x8xf32>
    %17 = vector.shape_cast %16 : vector<2x8xf32> to vector<2x8x1xf32>
    %18 = vector.broadcast %17 : vector<2x8x1xf32> to vector<2x8x128xf32>
    %19 = arith.mulf %1, %18 : vector<2x8x128xf32>
    %cst_7 = arith.constant dense<0.000000e+00> : vector<2x128xf32>
    %20 = vector.multi_reduction <add>, %19, %cst_7 [1] : vector<2x8x128xf32> to vector<2x128xf32>
    %c0_8 = arith.constant 0 : index
    %c0_9 = arith.constant 0 : index
    %21 = vector.load %arg4[%c0_8, %c0_9] : memref<128x128xf32, #tpu.memory_space<vmem>>, vector<128x128xf32>
    %cst_10 = arith.constant dense<0.000000e+00> : vector<2x128xf32>
    %22 = tpu.matmul %20, %21, %cst_10 {dimension_numbers = #tpu.dot_dimension_numbers<[1], [0], [0], [1], [0, 0, 1, 1], [], []>} : vector<2x128xf32>, vector<128x128xf32>, vector<2x128xf32> -> vector<2x128xf32>
    %c0_11 = arith.constant 0 : index
    %c0_12 = arith.constant 0 : index
    %23 = vector.load %arg5[%c0_11, %c0_12] : memref<1x128xf32, #tpu.memory_space<vmem>>, vector<1x128xf32>
    %24 = vector.broadcast %23 : vector<1x128xf32> to vector<2x128xf32>
    %25 = arith.addf %22, %24 : vector<2x128xf32>
    %26 = math.tanh %25 : vector<2x128xf32>
    %c0_13 = arith.constant 0 : index
    %c0_14 = arith.constant 0 : index
    %27 = vector.load %arg6[%c0_13, %c0_14] : memref<128x128xf32, #tpu.memory_space<vmem>>, vector<128x128xf32>
    %cst_15 = arith.constant dense<0.000000e+00> : vector<2x128xf32>
    %28 = tpu.matmul %26, %27, %cst_15 {dimension_numbers = #tpu.dot_dimension_numbers<[1], [0], [0], [1], [0, 0, 1, 1], [], []>} : vector<2x128xf32>, vector<128x128xf32>, vector<2x128xf32> -> vector<2x128xf32>
    %c0_16 = arith.constant 0 : index
    %c0_17 = arith.constant 0 : index
    %29 = vector.load %arg7[%c0_16, %c0_17] : memref<1x128xf32, #tpu.memory_space<vmem>>, vector<1x128xf32>
    %30 = vector.broadcast %29 : vector<1x128xf32> to vector<2x128xf32>
    %31 = arith.addf %28, %30 : vector<2x128xf32>
    %c0_18 = arith.constant 0 : index
    %c0_19 = arith.constant 0 : index
    %32 = vector.load %arg8[%c0_18, %c0_19] : memref<2x128xf32, #tpu.memory_space<vmem>>, vector<2x128xf32>
    tpu.vector_store %arg8[%c0_18, %c0_19], %31 {strides = array<i32>} : memref<2x128xf32, #tpu.memory_space<vmem>>, vector<2x128xf32>,
    return
  }
  func.func @transform_0(%arg0: i32) -> (i32, i32, i32) {
    %c0_i32 = arith.constant 0 : i32
    %c0_i32_0 = arith.constant 0 : i32
    %c0_i32_1 = arith.constant 0 : i32
    return %arg0, %c0_i32, %c0_i32_0 : i32, i32, i32
  }
  func.func @transform_1(%arg0: i32) -> (i32, i32) {
    %c0_i32 = arith.constant 0 : i32
    %c0_i32_0 = arith.constant 0 : i32
    return %arg0, %c0_i32 : i32, i32
  }
  func.func @transform_2(%arg0: i32) -> (i32, i32) {
    %c0_i32 = arith.constant 0 : i32
    %c0_i32_0 = arith.constant 0 : i32
    return %arg0, %c0_i32 : i32, i32
  }
  func.func @transform_3(%arg0: i32) -> (i32, i32) {
    %c0_i32 = arith.constant 0 : i32
    %c0_i32_0 = arith.constant 0 : i32
    %c0_i32_1 = arith.constant 0 : i32
    return %c0_i32, %c0_i32_0 : i32, i32
  }
  func.func @transform_4(%arg0: i32) -> (i32, i32) {
    %c0_i32 = arith.constant 0 : i32
    %c0_i32_0 = arith.constant 0 : i32
    %c0_i32_1 = arith.constant 0 : i32
    return %c0_i32, %c0_i32_0 : i32, i32
  }
  func.func @transform_5(%arg0: i32) -> (i32, i32) {
    %c0_i32 = arith.constant 0 : i32
    %c0_i32_0 = arith.constant 0 : i32
    %c0_i32_1 = arith.constant 0 : i32
    return %c0_i32, %c0_i32_0 : i32, i32
  }
  func.func @transform_6(%arg0: i32) -> (i32, i32) {
    %c0_i32 = arith.constant 0 : i32
    %c0_i32_0 = arith.constant 0 : i32
    %c0_i32_1 = arith.constant 0 : i32
    return %c0_i32, %c0_i32_0 : i32, i32
  }
  func.func @transform_7(%arg0: i32) -> (i32, i32) {
    %c0_i32 = arith.constant 0 : i32
    %c0_i32_0 = arith.constant 0 : i32
    return %arg0, %c0_i32 : i32, i32
  }
}

</mosaic_0001>

<llo_original>
// kernel: tpu_custom_call.1
$region0: #{tpu_custom_call.1}
  #allocation0 [shape = 'u32[]', space=smem, size = 0x4, offset = 0x4, fixed_abs, tag = 'smem constant byte address 0x4 - core index']
  #allocation1 [shape = 'u32[144,128]{1,0:T(1,128)}', space=vmem, size = 0x12000, scoped, tag = 'internal scratch']
  %s0 = inlined_call_operand.hbm [shape: bf16[2,8,128], index: 0, kind: input, shape index: {}]
  %s1 = inlined_call_operand.vmem [shape: f32[2,8], index: 1, kind: input, shape index: {}]
  %s2 = inlined_call_operand.vmem [shape: s32[2,1], index: 2, kind: input, shape index: {}]
  %s3 = inlined_call_operand.hbm [shape: f32[128,128], index: 3, kind: input, shape index: {}]
  %s4 = inlined_call_operand.vmem [shape: f32[1,128], index: 4, kind: input, shape index: {}]
  %s5 = inlined_call_operand.hbm [shape: f32[128,128], index: 5, kind: input, shape index: {}]
  %s6 = inlined_call_operand.vmem [shape: f32[1,128], index: 6, kind: input, shape index: {}]
  %s7 = inlined_call_operand.hbm [shape: f32[2,128], index: 7, kind: output, shape index: {}]
  %s8 = sld [smem:[#allocation0]]
  $region50: #{tpu_custom_call.1} parent=0
    _
  %s10 = ssub.s32 1, %s8
  %s11 = scalar_select 0, %s10, %s8
  $region1: #{tpu_custom_call.1} parent=0
    #allocation2 [shape = 'u8[4096]{0}', space=vmem, size = 0x1000, scoped, tag = 'input window, operand 0, single buffered']
    #allocation3 [shape = 's32[1]{0}', space=sflag, size = 0x4, scoped, tag = 'scoped memory for tpu_custom_call.1']
    #allocation4 [shape = 's32[1]{0}', space=sflag, size = 0x4, scoped, tag = 'scoped memory for tpu_custom_call.1']
    #allocation5 [shape = 'u8[65536]{0}', space=vmem, size = 0x10000, scoped, tag = 'input window, operand 3, single buffered']
    #allocation6 [shape = 's32[1]{0}', space=sflag, size = 0x4, scoped, tag = 'scoped memory for tpu_custom_call.1']
    #allocation7 [shape = 'u8[65536]{0}', space=vmem, size = 0x10000, scoped, tag = 'input window, operand 5, single buffered']
    #allocation8 [shape = 'u8[1024]{0}', space=vmem, size = 0x400, scoped, tag = 'output window, operand 0, single buffered']
    %12 = vsyncpa [#allocation3], 0
    %13 = vsyncpa [#allocation6], 0
    %14 = vsyncpa [#allocation4], 0
    // Predicated region
    $region2: #{tpu_custom_call.1} parent=1 // pred_check
      _
    $region3: #{tpu_custom_call.1} parent=1 // pred_check_branch
      %16 = sbr.rel (0) target = $region5
    $region4: #{tpu_custom_call.1} parent=1 // pred_region
      %s18 = ssub.s32 128, 128
      %19 = vsyncadd [#allocation3], %s18
      %s20 = sshll.u32 [#allocation2], 4
      %s21 = int_to_ptr.vmem [resolvable:$true] %s20
      %26 = dma.hbm_to_vmem [thread:$0]  %s0, 128, %s21, [#allocation3], 64, 64, 4
    $region5: #{tpu_custom_call.1} parent=1 // pred_fallthru
      _
    // Predicated region
    $region6: #{tpu_custom_call.1} parent=1 // pred_check
      _
    $region7: #{tpu_custom_call.1} parent=1 // pred_check_branch
      %28 = sbr.rel (0) target = $region9
    $region8: #{tpu_custom_call.1} parent=1 // pred_region
      _
    $region9: #{tpu_custom_call.1} parent=1 // pred_fallthru
      _
    // Predicated region
    $region10: #{tpu_custom_call.1} parent=1 // pred_check
      _
    $region11: #{tpu_custom_call.1} parent=1 // pred_check_branch
      %30 = sbr.rel (0) target = $region13
    $region12: #{tpu_custom_call.1} parent=1 // pred_region
      _
    $region13: #{tpu_custom_call.1} parent=1 // pred_fallthru
      _
    // Predicated region
    $region14: #{tpu_custom_call.1} parent=1 // pred_check
      _
    $region15: #{tpu_custom_call.1} parent=1 // pred_check_branch
      %32 = sbr.rel (0) target = $region17
    $region16: #{tpu_custom_call.1} parent=1 // pred_region
      %s34 = ssub.s32 2048, 2048
      %35 = vsyncadd [#allocation6], %s34
      %s36 = sshll.u32 [#allocation5], 4
      %s37 = int_to_ptr.vmem [resolvable:$true] %s36
      %42 = dma.hbm_to_vmem [thread:$0]  %s3, 2048, %s37, [#allocation6], 128, 128, 8
    $region17: #{tpu_custom_call.1} parent=1 // pred_fallthru
      _
    // Predicated region
    $region18: #{tpu_custom_call.1} parent=1 // pred_check
      _
    $region19: #{tpu_custom_call.1} parent=1 // pred_check_branch
      %44 = sbr.rel (0) target = $region21
    $region20: #{tpu_custom_call.1} parent=1 // pred_region
      _
    $region21: #{tpu_custom_call.1} parent=1 // pred_fallthru
      _
    // Predicated region
    $region22: #{tpu_custom_call.1} parent=1 // pred_check
      _
    $region23: #{tpu_custom_call.1} parent=1 // pred_check_branch
      %46 = sbr.rel (0) target = $region25
    $region24: #{tpu_custom_call.1} parent=1 // pred_region
      %s48 = ssub.s32 2048, 2048
      %49 = vsyncadd [#allocation6], %s48
      %s50 = sshll.u32 [#allocation7], 4
      %s51 = int_to_ptr.vmem [resolvable:$true] %s50
      %56 = dma.hbm_to_vmem [thread:$0]  %s5, 2048, %s51, [#allocation6], 128, 128, 8
    $region25: #{tpu_custom_call.1} parent=1 // pred_fallthru
      _
    // Predicated region
    $region26: #{tpu_custom_call.1} parent=1 // pred_check
      _
    $region27: #{tpu_custom_call.1} parent=1 // pred_check_branch
      %58 = sbr.rel (0) target = $region29
    $region28: #{tpu_custom_call.1} parent=1 // pred_region
      _
    $region29: #{tpu_custom_call.1} parent=1 // pred_fallthru
      _
    // Predicated region
    $region30: #{tpu_custom_call.1} parent=1 // pred_check
      _
    $region31: #{tpu_custom_call.1} parent=1 // pred_check_branch
      %60 = sbr.rel (0) target = $region33
    $region32: #{tpu_custom_call.1} parent=1 // pred_region
      %61 = dma.done [#allocation3], 128
    $region33: #{tpu_custom_call.1} parent=1 // pred_fallthru
      _
    // Predicated region
    $region34: #{tpu_custom_call.1} parent=1 // pred_check
      _
    $region35: #{tpu_custom_call.1} parent=1 // pred_check_branch
      %63 = sbr.rel (0) target = $region37
    $region36: #{tpu_custom_call.1} parent=1 // pred_region
      %64 = dma.done [#allocation6], 2048
    $region37: #{tpu_custom_call.1} parent=1 // pred_fallthru
      _
    // Predicated region
    $region38: #{tpu_custom_call.1} parent=1 // pred_check
      _
    $region39: #{tpu_custom_call.1} parent=1 // pred_check_branch
      %66 = sbr.rel (0) target = $region41
    $region40: #{tpu_custom_call.1} parent=1 // pred_region
      %67 = dma.done [#allocation6], 2048
    $region41: #{tpu_custom_call.1} parent=1 // pred_fallthru
      _
    %v68 = vld [vmem:[#allocation2] sm:$0xf]
    %v69 = vld [vmem:[#allocation2 + $0x4] sm:$0xf]
    %v70 = vunpack.c.l.bf16 %v68
    %v71 = vunpack.c.l.bf16 %v69
    %v72 = vld [vmem:[%s1] sm:$0x3]
    %v73 = vld [vmem:[%s2] sm:$0x3]
    %v74 = vlaneseq
    %v75 = vand.u32 %v74, 127
    %76 = vset.pattern.permute.xlu0 0
    %77 = vperm.xlu0 %76, %v73
    %v78 = vpop.permute.xlu0 %77
    %vm79 = vcmp.eq.s32.totalorder %v75, %v78
    %v80 = vsel %vm79, 1, 0
    %v81 = vcvt.s32.f32 %v80
    %vm82 = vcmask 58368
    %v83 = vsel %vm82, %v72, 0.0
    %84 = vadd.xlane.f32.xlu0 %v83
    %v85 = vpop.xlane.xlu0 %84
    %v86 = vmax.f32 %v85, 1.0
    %v87 = vrcp.pop %v86
    %v88 = vmul.f32 %v72, %v87
    %v89 = vadd.f32 %v88, %v81
    %v90 = vlaneseq
    %v91 = vshrl.u32 %v90, 7
    %v92 = vsub.s32 0, %v91
    %v93 = vrot.slane %v89, %v92
    %95 = vbcast.lane.b32.xlu0 %v93, 256
    %v96 = vpop.permute.xlu0 %95
    %v97 = vlaneseq
    %v98 = vshrl.u32 %v97, 7
    %v99 = vsub.s32 1, %v98
    %v100 = vrot.slane %v89, %v99
    %102 = vbcast.lane.b32.xlu0 %v100, 256
    %v103 = vpop.permute.xlu0 %102
    %v104 = vmul.f32 %v70, %v96
    %v105 = vmul.f32 %v71, %v103
    %v106 = vrot.slane %v104, 4
    %v107 = vadd.f32 %v104, %v106
    %v108 = vrot.slane %v107, 2
    %v109 = vadd.f32 %v107, %v108
    %v110 = vrot.slane %v109, 1
    %v111 = vadd.f32 %v109, %v110
    %v112 = vrot.slane %v105, 4
    %v113 = vadd.f32 %v105, %v112
    %v114 = vrot.slane %v113, 2
    %v115 = vadd.f32 %v113, %v114
    %v116 = vrot.slane %v115, 1
    %v117 = vadd.f32 %v115, %v116
    %v118 = vld [vmem:[#allocation5] sm:$0xff]
    %v119 = vld [vmem:[#allocation5 + $0x8] sm:$0xff]
    %v120 = vld [vmem:[#allocation5 + $0x10] sm:$0xff]
    %v121 = vld [vmem:[#allocation5 + $0x18] sm:$0xff]
    %v122 = vld [vmem:[#allocation5 + $0x20] sm:$0xff]
    %v123 = vld [vmem:[#allocation5 + $0x28] sm:$0xff]
    %v124 = vld [vmem:[#allocation5 + $0x30] sm:$0xff]
    %v125 = vld [vmem:[#allocation5 + $0x38] sm:$0xff]
    %v126 = vld [vmem:[#allocation5 + $0x40] sm:$0xff]
    %v127 = vld [vmem:[#allocation5 + $0x48] sm:$0xff]
    %v128 = vld [vmem:[#allocation5 + $0x50] sm:$0xff]
    %v129 = vld [vmem:[#allocation5 + $0x58] sm:$0xff]
    %v130 = vld [vmem:[#allocation5 + $0x60] sm:$0xff]
    %v131 = vld [vmem:[#allocation5 + $0x68] sm:$0xff]
    %v132 = vld [vmem:[#allocation5 + $0x70] sm:$0xff]
    %v133 = vld [vmem:[#allocation5 + $0x78] sm:$0xff]
    %v134 = vld [vmem:[%s4] sm:$0x1]
    %v136 = vlaneseq
    %v137 = vshrl.u32 %v136, 7
    %v138 = vsub.s32 0, %v137
    %v139 = vrot.slane %v134, %v138
    %vm143 = vcmask 1041409
    %v144 = vsel %vm143, %v117, %v111
    %146 = vmatprep.subr.mxu0 0.0
    %147 = vmatpush1.msra.mxu0 %v133
    %148 = vmatprep.subr.mxu0 0.0
    %149 = vmatpush1.msra.mxu0 %v132
    %150 = vmatprep.subr.mxu0 0.0
    %151 = vmatpush1.msra.mxu0 %v131
    %152 = vmatprep.subr.mxu0 0.0
    %153 = vmatpush1.msra.mxu0 %v130
    %154 = vmatprep.subr.mxu0 0.0
    %155 = vmatpush1.msra.mxu0 %v129
    %156 = vmatprep.subr.mxu0 0.0
    %157 = vmatpush1.msra.mxu0 %v128
    %158 = vmatprep.subr.mxu0 0.0
    %159 = vmatpush1.msra.mxu0 %v127
    %160 = vmatprep.subr.mxu0 0.0
    %161 = vmatpush1.msra.mxu0 %v126
    %162 = vmatprep.subr.mxu0 0.0
    %163 = vmatpush1.msra.mxu0 %v125
    %164 = vmatprep.subr.mxu0 0.0
    %165 = vmatpush1.msra.mxu0 %v124
    %166 = vmatprep.subr.mxu0 0.0
    %167 = vmatpush1.msra.mxu0 %v123
    %168 = vmatprep.subr.mxu0 0.0
    %169 = vmatpush1.msra.mxu0 %v122
    %170 = vmatprep.subr.mxu0 0.0
    %171 = vmatpush1.msra.mxu0 %v121
    %172 = vmatprep.subr.mxu0 0.0
    %173 = vmatpush1.msra.mxu0 %v120
    %174 = vmatprep.subr.mxu0 0.0
    %175 = vmatpush1.msra.mxu0 %v119
    %176 = vmatprep.subr.mxu0 0.0
    %177 = vmatpush1.msra.mxu0 %v118
    %178 = vmatprep.subr.mxu0 0.0
    %179 = vmatpush2.msra.mxu0 0.0
    %180 = vmatprep.subr.mxu0 0.0
    %181 = vmatpush2.msra.mxu0 0.0
    %182 = vmatprep.subr.mxu0 0.0
    %183 = vmatpush2.msra.mxu0 0.0
    %184 = vmatprep.subr.mxu0 0.0
    %185 = vmatpush2.msra.mxu0 0.0
    %186 = vmatprep.subr.mxu0 0.0
    %187 = vmatpush2.msra.mxu0 0.0
    %188 = vmatprep.subr.mxu0 0.0
    %189 = vmatpush2.msra.mxu0 0.0
    %190 = vmatprep.subr.mxu0 0.0
    %191 = vmatpush2.msra.mxu0 0.0
    %192 = vmatprep.subr.mxu0 0.0
    %193 = vmatpush2.msra.mxu0 0.0
    %194 = vmatprep.subr.mxu0 0.0
    %195 = vmatpush2.msra.mxu0 0.0
    %196 = vmatprep.subr.mxu0 0.0
    %197 = vmatpush2.msra.mxu0 0.0
    %198 = vmatprep.subr.mxu0 0.0
    %199 = vmatpush2.msra.mxu0 0.0
    %200 = vmatprep.subr.mxu0 0.0
    %201 = vmatpush2.msra.mxu0 0.0
    %202 = vmatprep.subr.mxu0 0.0
    %203 = vmatpush2.msra.mxu0 0.0
    %204 = vmatprep.subr.mxu0 0.0
    %205 = vmatpush2.msra.mxu0 0.0
    %206 = vmatprep.subr.mxu0 0.0
    %207 = vmatpush2.msra.mxu0 0.0
    %208 = vmatprep.subr.mxu0 0.0
    %209 = vmatpush2.msra.mxu0 0.0
    %210 = vmatprep.mubr.f32.mxu0 0.0
    %211 = vmatmul.mubr.f32.gmra.mxu0 %v144
    %v212 = vpop.f32.mrf.mxu0
    %v213 = vadd.f32 %v139, %v212
    %v214 = vpop.f32.mrf.mxu0
    %215 = vdwg.mxu0
    %v216 = vtanh.pop %v213
    %v217 = vld [vmem:[#allocation7] sm:$0xff]
    %v218 = vld [vmem:[#allocation7 + $0x8] sm:$0xff]
    %v219 = vld [vmem:[#allocation7 + $0x10] sm:$0xff]
    %v220 = vld [vmem:[#allocation7 + $0x18] sm:$0xff]
    %v221 = vld [vmem:[#allocation7 + $0x20] sm:$0xff]
    %v222 = vld [vmem:[#allocation7 + $0x28] sm:$0xff]
    %v223 = vld [vmem:[#allocation7 + $0x30] sm:$0xff]
    %v224 = vld [vmem:[#allocation7 + $0x38] sm:$0xff]
    %v225 = vld [vmem:[#allocation7 + $0x40] sm:$0xff]
    %v226 = vld [vmem:[#allocation7 + $0x48] sm:$0xff]
    %v227 = vld [vmem:[#allocation7 + $0x50] sm:$0xff]
    %v228 = vld [vmem:[#allocation7 + $0x58] sm:$0xff]
    %v229 = vld [vmem:[#allocation7 + $0x60] sm:$0xff]
    %v230 = vld [vmem:[#allocation7 + $0x68] sm:$0xff]
    %v231 = vld [vmem:[#allocation7 + $0x70] sm:$0xff]
    %v232 = vld [vmem:[#allocation7 + $0x78] sm:$0xff]
    %v233 = vld [vmem:[%s6] sm:$0x1]
    %v235 = vlaneseq
    %v236 = vshrl.u32 %v235, 7
    %v237 = vsub.s32 0, %v236
    %v238 = vrot.slane %v233, %v237
    %240 = vmatprep.subr.mxu0 0.0
    %241 = vmatpush1.msra.mxu0 %v232
    %242 = vmatprep.subr.mxu0 0.0
    %243 = vmatpush1.msra.mxu0 %v231
    %244 = vmatprep.subr.mxu0 0.0
    %245 = vmatpush1.msra.mxu0 %v230
    %246 = vmatprep.subr.mxu0 0.0
    %247 = vmatpush1.msra.mxu0 %v229
    %248 = vmatprep.subr.mxu0 0.0
    %249 = vmatpush1.msra.mxu0 %v228
    %250 = vmatprep.subr.mxu0 0.0
    %251 = vmatpush1.msra.mxu0 %v227
    %252 = vmatprep.subr.mxu0 0.0
    %253 = vmatpush1.msra.mxu0 %v226
    %254 = vmatprep.subr.mxu0 0.0
    %255 = vmatpush1.msra.mxu0 %v225
    %256 = vmatprep.subr.mxu0 0.0
    %257 = vmatpush1.msra.mxu0 %v224
    %258 = vmatprep.subr.mxu0 0.0
    %259 = vmatpush1.msra.mxu0 %v223
    %260 = vmatprep.subr.mxu0 0.0
    %261 = vmatpush1.msra.mxu0 %v222
    %262 = vmatprep.subr.mxu0 0.0
    %263 = vmatpush1.msra.mxu0 %v221
    %264 = vmatprep.subr.mxu0 0.0
    %265 = vmatpush1.msra.mxu0 %v220
    %266 = vmatprep.subr.mxu0 0.0
    %267 = vmatpush1.msra.mxu0 %v219
    %268 = vmatprep.subr.mxu0 0.0
    %269 = vmatpush1.msra.mxu0 %v218
    %270 = vmatprep.subr.mxu0 0.0
    %271 = vmatpush1.msra.mxu0 %v217
    %272 = vmatprep.subr.mxu0 0.0
    %273 = vmatpush2.msra.mxu0 0.0
    %274 = vmatprep.subr.mxu0 0.0
    %275 = vmatpush2.msra.mxu0 0.0
    %276 = vmatprep.subr.mxu0 0.0
    %277 = vmatpush2.msra.mxu0 0.0
    %278 = vmatprep.subr.mxu0 0.0
    %279 = vmatpush2.msra.mxu0 0.0
    %280 = vmatprep.subr.mxu0 0.0
    %281 = vmatpush2.msra.mxu0 0.0
    %282 = vmatprep.subr.mxu0 0.0
    %283 = vmatpush2.msra.mxu0 0.0
    %284 = vmatprep.subr.mxu0 0.0
    %285 = vmatpush2.msra.mxu0 0.0
    %286 = vmatprep.subr.mxu0 0.0
    %287 = vmatpush2.msra.mxu0 0.0
    %288 = vmatprep.subr.mxu0 0.0
    %289 = vmatpush2.msra.mxu0 0.0
    %290 = vmatprep.subr.mxu0 0.0
    %291 = vmatpush2.msra.mxu0 0.0
    %292 = vmatprep.subr.mxu0 0.0
    %293 = vmatpush2.msra.mxu0 0.0
    %294 = vmatprep.subr.mxu0 0.0
    %295 = vmatpush2.msra.mxu0 0.0
    %296 = vmatprep.subr.mxu0 0.0
    %297 = vmatpush2.msra.mxu0 0.0
    %298 = vmatprep.subr.mxu0 0.0
    %299 = vmatpush2.msra.mxu0 0.0
    %300 = vmatprep.subr.mxu0 0.0
    %301 = vmatpush2.msra.mxu0 0.0
    %302 = vmatprep.subr.mxu0 0.0
    %303 = vmatpush2.msra.mxu0 0.0
    %304 = vmatprep.mubr.f32.mxu0 0.0
    %305 = vmatmul.mubr.f32.gmra.mxu0 %v216
    %v306 = vpop.f32.mrf.mxu0
    %v307 = vadd.f32 %v238, %v306
    %v308 = vpop.f32.mrf.mxu0
    %309 = vdwg.mxu0
    %310 = vst [vmem:[#allocation8] sm:$0x3] %v307
    // Predicated region
    $region42: #{tpu_custom_call.1} parent=1 // pred_check
      _
    $region43: #{tpu_custom_call.1} parent=1 // pred_check_branch
      %312 = sbr.rel (0) target = $region45
    $region44: #{tpu_custom_call.1} parent=1 // pred_region
      %s314 = ssub.s32 32, 32
      %315 = vsyncadd [#allocation4], %s314
      %s317 = sshll.u32 [#allocation8], 4
      %s318 = int_to_ptr.vmem [resolvable:$true] %s317
      %320 = dma.vmem_to_hbm [thread:$0]  %s318, 32, %s7, [#allocation4]
    $region45: #{tpu_custom_call.1} parent=1 // pred_fallthru
      _
    // Predicated region
    $region46: #{tpu_custom_call.1} parent=1 // pred_check
      _
    $region47: #{tpu_custom_call.1} parent=1 // pred_check_branch
      %322 = sbr.rel (0) target = $region49
    $region48: #{tpu_custom_call.1} parent=1 // pred_region
      %323 = dma.done [#allocation4], 32
    $region49: #{tpu_custom_call.1} parent=1 // pred_fallthru
      _
    %324 = vsyncpa [#allocation3], 1
    %325 = vsyncpa [#allocation6], 1
    %326 = vsyncpa [#allocation4], 1

</llo_original>
